<compile_context>
chip_gen: v7x
topology: tpu7x:2x2x1
jax: 0.10.0
libtpu: 0.0.40
codegen_flags: <defaults>
</compile_context>

<pallas_src>
import jax
import jax.numpy as jnp
from jax.experimental import pallas as pl
from jax.experimental.pallas import tpu as pltpu


def rnn_fc_kernel(x_ref, slab_ref, rhs_ref, y_ref):
    """Single-layer Elman RNN (tanh) over the full sequence + Linear(h_T).

    x_ref    : (seq, batch, 1)    f32   time-major input (PyTorch nn.RNN layout)
    slab_ref : (3, width)         f32   row0 = [W_ih^T | 0]
                                        row1 = [b_ih + b_hh | 0]
                                        row2 = [0 | b_fc]
    rhs_ref  : (width, width)     bf16  [[W_hh^T, W_fc^T],
                                         [  0   ,   0   ]]   (rows >= hidden are zero)
    y_ref    : (batch, width)     f32   columns hidden: hold fc(h_T); wrapper slices.

    width = hidden + out (= 25) — still one 128-lane MXU tile, so the padding
    columns/rows are free and no lane slicing is needed anywhere in the kernel.
    """
    seq = x_ref.shape[0]

    # Single loop-invariant MXU RHS, loaded once and reused by every dot below
    # (recurrence + final fc), so the weight push can stay resident.
    rhs = rhs_ref[...]

    wih = slab_ref[0:1, :]     # (1, width)  W_ih^T, zero-padded
    bias = slab_ref[1:2, :]    # (1, width)  b_ih + b_hh, zero-padded
    bfc = slab_ref[2:3, :]     # (1, width)  b_fc in columns hidden:, zeros elsewhere

    # Hoisted input projection + fused bias for ALL timesteps (pure VPU, off
    # the recurrent chain).  Staged (seq, batch, width): pre_in[t] is a whole,
    # sublane-0-aligned tile — no per-step sublane extracts on the chain.
    pre_in = x_ref[...] * wih + bias                     # (seq, batch, width)

    # h_0 = zeros (PyTorch default) -> step 0 is tanh only, no matmul.
    h = jnp.tanh(pre_in[0])                              # (batch, width)
    for t in range(1, seq):
        # Per-step critical path: cast -> matmul -> add -> tanh.
        z = jnp.dot(h.astype(jnp.bfloat16), rhs,
                    preferred_element_type=jnp.float32)  # (batch, width)
        h = jnp.tanh(pre_in[t] + z)

    # Final fc reuses the SAME resident RHS; its fc columns are in z[:, hidden:].
    z = jnp.dot(h.astype(jnp.bfloat16), rhs,
                preferred_element_type=jnp.float32)
    y_ref[...] = z + bfc


def rnn_forward(x, params):
    """x: (seq, batch, 1) float32 -> y: (1, batch, 5) float32."""
    seq, batch, input_size = x.shape
    assert input_size == 1
    wih_t, whh_t, bih, bhh, wfc_t, bfc = params
    hidden = whh_t.shape[0]
    out_dim = wfc_t.shape[1]
    width = hidden + out_dim

    # --- pack the five small weight/bias tensors into two slabs (2 DMAs) ---
    # f32 VPU slab.
    slab = jnp.zeros((3, width), jnp.float32)
    slab = slab.at[0, :hidden].set(wih_t[0])
    slab = slab.at[1, :hidden].set((bih + bhh)[0])
    slab = slab.at[2, hidden:].set(bfc[0])

    # bf16 MXU RHS: [W_hh^T | W_fc^T] zero-padded to square so the fc-junk
    # columns of h never re-enter the recurrence.
    rhs = jnp.zeros((width, width), jnp.float32)
    rhs = rhs.at[:hidden, :hidden].set(whh_t)
    rhs = rhs.at[:hidden, hidden:].set(wfc_t)
    rhs = rhs.astype(jnp.bfloat16)

    flops = (2 * seq * batch * width * width      # recurrent + fc matmuls
             + 2 * seq * batch * width)           # input projection
    transcendentals = seq * batch * width         # tanh
    bytes_accessed = 4 * (x.size + slab.size + batch * width) + 2 * rhs.size

    vmem = pl.BlockSpec(memory_space=pltpu.MemorySpace.VMEM)
    y_full = pl.pallas_call(
        rnn_fc_kernel,
        out_shape=jax.ShapeDtypeStruct((batch, width), jnp.float32),
        in_specs=[vmem, vmem, vmem],
        out_specs=vmem,
        cost_estimate=pl.CostEstimate(flops=flops,
                                      transcendentals=transcendentals,
                                      bytes_accessed=bytes_accessed),
    )(x, slab, rhs)

    # PyTorch: h has shape (num_layers, batch, hidden); fc(h) -> (num_layers, batch, 5)
    return y_full[:, hidden:].reshape(1, batch, out_dim)


def init_params(key, input_size=1, hidden=20, out_dim=5):
    """Deterministic init mimicking PyTorch's uniform(-1/sqrt(hidden), 1/sqrt(hidden))."""
    ks = jax.random.split(key, 6)
    bound = 1.0 / jnp.sqrt(jnp.float32(hidden))
    u = lambda k, shape: jax.random.uniform(k, shape, jnp.float32, -bound, bound)
    wih_t = u(ks[0], (input_size, hidden))   # W_ih^T
    whh_t = u(ks[1], (hidden, hidden))       # W_hh^T
    bih = u(ks[2], (1, hidden))
    bhh = u(ks[3], (1, hidden))
    wfc_t = u(ks[4], (hidden, out_dim))      # W_fc^T
    bfc = u(ks[5], (1, out_dim))
    return wih_t, whh_t, bih, bhh, wfc_t, bfc


def reference_forward(x, params):
    """Plain-JAX f32 reference matching torch semantics (for sanity check)."""
    wih_t, whh_t, bih, bhh, wfc_t, bfc = params
    seq, batch, _ = x.shape
    h = jnp.zeros((batch, whh_t.shape[0]), jnp.float32)
    for t in range(seq):
        h = jnp.tanh(x[t] * wih_t + bih + h @ whh_t + bhh)
    return (h @ wfc_t + bfc).reshape(1, batch, -1)


if __name__ == "__main__":
    key = jax.random.PRNGKey(0)
    k_x, k_p = jax.random.split(key)

    seq, batch, input_size = 8, 2, 1
    x = jax.random.normal(k_x, (seq, batch, input_size), jnp.float32)
    params = init_params(k_p)

    y = rnn_forward(x, params)
    y = jax.block_until_ready(y)

    y_ref = reference_forward(x, params)
    assert y.shape == (1, batch, 5)
    # Tolerance relaxed vs. the pure-f32 reference because the recurrent and fc
    # matmuls use bf16 MXU operands (f32 accumulation); the original PyTorch
    # module is f64, so exact parity was never expected.
    assert jnp.allclose(y, y_ref, atol=5e-2, rtol=5e-2)

    print("KERNEL_OK")
</pallas_src>

<mosaic_0001>
module attributes {stable_mosaic.version = 11 : i64} {
  func.func @rnn_fc_kernel(%arg0: memref<8x2x1xf32, #tpu.memory_space<vmem>>, %arg1: memref<3x25xf32, #tpu.memory_space<vmem>>, %arg2: memref<25x25xbf16, #tpu.memory_space<vmem>>, %arg3: memref<2x25xf32, #tpu.memory_space<vmem>>) attributes {dimension_semantics = [], scalar_prefetch = 0 : i64, scratch_operands = 0 : i64, tpu.core_type = #tpu.core_type<tc>} {
    %c0 = arith.constant 0 : index
    %c0_0 = arith.constant 0 : index
    %0 = vector.load %arg2[%c0, %c0_0] : memref<25x25xbf16, #tpu.memory_space<vmem>>, vector<25x25xbf16>
    %c0_1 = arith.constant 0 : index
    %c0_2 = arith.constant 0 : index
    %1 = vector.load %arg1[%c0_1, %c0_2] : memref<3x25xf32, #tpu.memory_space<vmem>>, vector<1x25xf32>
    %c1 = arith.constant 1 : index
    %c0_3 = arith.constant 0 : index
    %2 = vector.load %arg1[%c1, %c0_3] : memref<3x25xf32, #tpu.memory_space<vmem>>, vector<1x25xf32>
    %c2 = arith.constant 2 : index
    %c0_4 = arith.constant 0 : index
    %3 = vector.load %arg1[%c2, %c0_4] : memref<3x25xf32, #tpu.memory_space<vmem>>, vector<1x25xf32>
    %c0_5 = arith.constant 0 : index
    %c0_6 = arith.constant 0 : index
    %c0_7 = arith.constant 0 : index
    %4 = vector.load %arg0[%c0_5, %c0_6, %c0_7] : memref<8x2x1xf32, #tpu.memory_space<vmem>>, vector<8x2x1xf32>
    %5 = vector.shape_cast %1 : vector<1x25xf32> to vector<1x1x25xf32>
    %6 = vector.broadcast %4 : vector<8x2x1xf32> to vector<8x2x25xf32>
    %7 = vector.broadcast %5 : vector<1x1x25xf32> to vector<8x2x25xf32>
    %8 = arith.mulf %6, %7 : vector<8x2x25xf32>
    %9 = vector.shape_cast %2 : vector<1x25xf32> to vector<1x1x25xf32>
    %10 = vector.broadcast %9 : vector<1x1x25xf32> to vector<8x2x25xf32>
    %11 = arith.addf %8, %10 : vector<8x2x25xf32>
    %12 = vector.extract_strided_slice %11 {offsets = [0, 0, 0], sizes = [1, 2, 25], strides = [1, 1, 1]} : vector<8x2x25xf32> to vector<1x2x25xf32>
    %13 = vector.shape_cast %12 : vector<1x2x25xf32> to vector<2x25xf32>
    %14 = math.tanh %13 : vector<2x25xf32>
    %15 = arith.truncf %14 : vector<2x25xf32> to vector<2x25xbf16>
    %cst = arith.constant dense<0.000000e+00> : vector<2x25xf32>
    %16 = tpu.matmul %15, %0, %cst {dimension_numbers = #tpu.dot_dimension_numbers<[1], [0], [0], [1], [0, 0, 1, 1], [], []>} : vector<2x25xbf16>, vector<25x25xbf16>, vector<2x25xf32> -> vector<2x25xf32>
    %17 = vector.extract_strided_slice %11 {offsets = [1, 0, 0], sizes = [1, 2, 25], strides = [1, 1, 1]} : vector<8x2x25xf32> to vector<1x2x25xf32>
    %18 = vector.shape_cast %17 : vector<1x2x25xf32> to vector<2x25xf32>
    %19 = arith.addf %18, %16 : vector<2x25xf32>
    %20 = math.tanh %19 : vector<2x25xf32>
    %21 = arith.truncf %20 : vector<2x25xf32> to vector<2x25xbf16>
    %cst_8 = arith.constant dense<0.000000e+00> : vector<2x25xf32>
    %22 = tpu.matmul %21, %0, %cst_8 {dimension_numbers = #tpu.dot_dimension_numbers<[1], [0], [0], [1], [0, 0, 1, 1], [], []>} : vector<2x25xbf16>, vector<25x25xbf16>, vector<2x25xf32> -> vector<2x25xf32>
    %23 = vector.extract_strided_slice %11 {offsets = [2, 0, 0], sizes = [1, 2, 25], strides = [1, 1, 1]} : vector<8x2x25xf32> to vector<1x2x25xf32>
    %24 = vector.shape_cast %23 : vector<1x2x25xf32> to vector<2x25xf32>
    %25 = arith.addf %24, %22 : vector<2x25xf32>
    %26 = math.tanh %25 : vector<2x25xf32>
    %27 = arith.truncf %26 : vector<2x25xf32> to vector<2x25xbf16>
    %cst_9 = arith.constant dense<0.000000e+00> : vector<2x25xf32>
    %28 = tpu.matmul %27, %0, %cst_9 {dimension_numbers = #tpu.dot_dimension_numbers<[1], [0], [0], [1], [0, 0, 1, 1], [], []>} : vector<2x25xbf16>, vector<25x25xbf16>, vector<2x25xf32> -> vector<2x25xf32>
    %29 = vector.extract_strided_slice %11 {offsets = [3, 0, 0], sizes = [1, 2, 25], strides = [1, 1, 1]} : vector<8x2x25xf32> to vector<1x2x25xf32>
    %30 = vector.shape_cast %29 : vector<1x2x25xf32> to vector<2x25xf32>
    %31 = arith.addf %30, %28 : vector<2x25xf32>
    %32 = math.tanh %31 : vector<2x25xf32>
    %33 = arith.truncf %32 : vector<2x25xf32> to vector<2x25xbf16>
    %cst_10 = arith.constant dense<0.000000e+00> : vector<2x25xf32>
    %34 = tpu.matmul %33, %0, %cst_10 {dimension_numbers = #tpu.dot_dimension_numbers<[1], [0], [0], [1], [0, 0, 1, 1], [], []>} : vector<2x25xbf16>, vector<25x25xbf16>, vector<2x25xf32> -> vector<2x25xf32>
    %35 = vector.extract_strided_slice %11 {offsets = [4, 0, 0], sizes = [1, 2, 25], strides = [1, 1, 1]} : vector<8x2x25xf32> to vector<1x2x25xf32>
    %36 = vector.shape_cast %35 : vector<1x2x25xf32> to vector<2x25xf32>
    %37 = arith.addf %36, %34 : vector<2x25xf32>
    %38 = math.tanh %37 : vector<2x25xf32>
    %39 = arith.truncf %38 : vector<2x25xf32> to vector<2x25xbf16>
    %cst_11 = arith.constant dense<0.000000e+00> : vector<2x25xf32>
    %40 = tpu.matmul %39, %0, %cst_11 {dimension_numbers = #tpu.dot_dimension_numbers<[1], [0], [0], [1], [0, 0, 1, 1], [], []>} : vector<2x25xbf16>, vector<25x25xbf16>, vector<2x25xf32> -> vector<2x25xf32>
    %41 = vector.extract_strided_slice %11 {offsets = [5, 0, 0], sizes = [1, 2, 25], strides = [1, 1, 1]} : vector<8x2x25xf32> to vector<1x2x25xf32>
    %42 = vector.shape_cast %41 : vector<1x2x25xf32> to vector<2x25xf32>
    %43 = arith.addf %42, %40 : vector<2x25xf32>
    %44 = math.tanh %43 : vector<2x25xf32>
    %45 = arith.truncf %44 : vector<2x25xf32> to vector<2x25xbf16>
    %cst_12 = arith.constant dense<0.000000e+00> : vector<2x25xf32>
    %46 = tpu.matmul %45, %0, %cst_12 {dimension_numbers = #tpu.dot_dimension_numbers<[1], [0], [0], [1], [0, 0, 1, 1], [], []>} : vector<2x25xbf16>, vector<25x25xbf16>, vector<2x25xf32> -> vector<2x25xf32>
    %47 = vector.extract_strided_slice %11 {offsets = [6, 0, 0], sizes = [1, 2, 25], strides = [1, 1, 1]} : vector<8x2x25xf32> to vector<1x2x25xf32>
    %48 = vector.shape_cast %47 : vector<1x2x25xf32> to vector<2x25xf32>
    %49 = arith.addf %48, %46 : vector<2x25xf32>
    %50 = math.tanh %49 : vector<2x25xf32>
    %51 = arith.truncf %50 : vector<2x25xf32> to vector<2x25xbf16>
    %cst_13 = arith.constant dense<0.000000e+00> : vector<2x25xf32>
    %52 = tpu.matmul %51, %0, %cst_13 {dimension_numbers = #tpu.dot_dimension_numbers<[1], [0], [0], [1], [0, 0, 1, 1], [], []>} : vector<2x25xbf16>, vector<25x25xbf16>, vector<2x25xf32> -> vector<2x25xf32>
    %53 = vector.extract_strided_slice %11 {offsets = [7, 0, 0], sizes = [1, 2, 25], strides = [1, 1, 1]} : vector<8x2x25xf32> to vector<1x2x25xf32>
    %54 = vector.shape_cast %53 : vector<1x2x25xf32> to vector<2x25xf32>
    %55 = arith.addf %54, %52 : vector<2x25xf32>
    %56 = math.tanh %55 : vector<2x25xf32>
    %57 = arith.truncf %56 : vector<2x25xf32> to vector<2x25xbf16>
    %cst_14 = arith.constant dense<0.000000e+00> : vector<2x25xf32>
    %58 = tpu.matmul %57, %0, %cst_14 {dimension_numbers = #tpu.dot_dimension_numbers<[1], [0], [0], [1], [0, 0, 1, 1], [], []>} : vector<2x25xbf16>, vector<25x25xbf16>, vector<2x25xf32> -> vector<2x25xf32>
    %59 = vector.broadcast %3 : vector<1x25xf32> to vector<2x25xf32>
    %60 = arith.addf %58, %59 : vector<2x25xf32>
    %c0_15 = arith.constant 0 : index
    %c0_16 = arith.constant 0 : index
    %61 = vector.load %arg3[%c0_15, %c0_16] : memref<2x25xf32, #tpu.memory_space<vmem>>, vector<2x25xf32>
    tpu.vector_store %arg3[%c0_15, %c0_16], %60 {strides = array<i32>} : memref<2x25xf32, #tpu.memory_space<vmem>>, vector<2x25xf32>,
    return
  }
}

</mosaic_0001>

<llo_original>
// kernel: tpu_custom_call.1
$region0: #{tpu_custom_call.1}
  #allocation0 [shape = 'u32[]', space=smem, size = 0x4, offset = 0x4, fixed_abs, tag = 'smem constant byte address 0x4 - core index']
  #allocation1 [shape = 'u32[144,128]{1,0:T(1,128)}', space=vmem, size = 0x12000, scoped, tag = 'internal scratch']
  %s0 = inlined_call_operand.vmem [shape: f32[8,2,1], index: 0, kind: input, shape index: {}]
  %s1 = inlined_call_operand.vmem [shape: f32[3,25], index: 1, kind: input, shape index: {}]
  %s2 = inlined_call_operand.vmem [shape: bf16[25,25], index: 2, kind: input, shape index: {}]
  %s3 = inlined_call_operand.hbm [shape: f32[2,25], index: 3, kind: output, shape index: {}]
  %s4 = sld [smem:[#allocation0]]
  $region22: #{tpu_custom_call.1} parent=0
    _
  %s6 = ssub.s32 1, %s4
  %s7 = scalar_select 0, %s6, %s4
  $region1: #{tpu_custom_call.1} parent=0
    #allocation2 [shape = 'u8[1024]{0}', space=vmem, size = 0x400, scoped, tag = 'output window, operand 0, single buffered']
    #allocation3 [shape = 's32[1]{0}', space=sflag, size = 0x4, scoped, tag = 'scoped memory for tpu_custom_call.1']
    %8 = vsyncpa [#allocation3], 0
    // Predicated region
    $region2: #{tpu_custom_call.1} parent=1 // pred_check
      _
    $region3: #{tpu_custom_call.1} parent=1 // pred_check_branch
      %10 = sbr.rel (0) target = $region5
    $region4: #{tpu_custom_call.1} parent=1 // pred_region
      _
    $region5: #{tpu_custom_call.1} parent=1 // pred_fallthru
      _
    // Predicated region
    $region6: #{tpu_custom_call.1} parent=1 // pred_check
      _
    $region7: #{tpu_custom_call.1} parent=1 // pred_check_branch
      %12 = sbr.rel (0) target = $region9
    $region8: #{tpu_custom_call.1} parent=1 // pred_region
      _
    $region9: #{tpu_custom_call.1} parent=1 // pred_fallthru
      _
    // Predicated region
    $region10: #{tpu_custom_call.1} parent=1 // pred_check
      _
    $region11: #{tpu_custom_call.1} parent=1 // pred_check_branch
      %14 = sbr.rel (0) target = $region13
    $region12: #{tpu_custom_call.1} parent=1 // pred_region
      _
    $region13: #{tpu_custom_call.1} parent=1 // pred_fallthru
      _
    %v16 = vld [vmem:[%s2] sm:$0xf]
    %v17 = vld [vmem:[%s2 + $0x4] sm:$0xf]
    %v18 = vld [vmem:[%s2 + $0x8] sm:$0xf]
    %v19 = vld [vmem:[%s2 + $0xc] sm:$0x1]
    %v20 = vld [vmem:[%s1] sm:$0x1]
    %v21 = vld [vmem:[%s1 + $0x1] sm:$0x1]
    %v22 = vld [vmem:[%s1 + $0x2] sm:$0x1]
    %v23 = vld [vmem:[%s0] sm:$0x3]
    %v24 = vld [vmem:[%s0 + $0x2] sm:$0x3]
    %v25 = vld [vmem:[%s0 + $0x4] sm:$0x3]
    %v26 = vld [vmem:[%s0 + $0x6] sm:$0x3]
    %v27 = vld [vmem:[%s0 + $0x8] sm:$0x3]
    %v28 = vld [vmem:[%s0 + $0xa] sm:$0x3]
    %v29 = vld [vmem:[%s0 + $0xc] sm:$0x3]
    %v30 = vld [vmem:[%s0 + $0xe] sm:$0x3]
    %32 = vset.pattern.permute.xlu0 0
    %33 = vperm.xlu0 %32, %v23
    %v34 = vpop.permute.xlu0 %33
    %37 = vset.pattern.permute.xlu0 0
    %38 = vperm.xlu0 %37, %v24
    %v39 = vpop.permute.xlu0 %38
    %42 = vset.pattern.permute.xlu0 0
    %43 = vperm.xlu0 %42, %v25
    %v44 = vpop.permute.xlu0 %43
    %47 = vset.pattern.permute.xlu0 0
    %48 = vperm.xlu0 %47, %v26
    %v49 = vpop.permute.xlu0 %48
    %52 = vset.pattern.permute.xlu0 0
    %53 = vperm.xlu0 %52, %v27
    %v54 = vpop.permute.xlu0 %53
    %57 = vset.pattern.permute.xlu0 0
    %58 = vperm.xlu0 %57, %v28
    %v59 = vpop.permute.xlu0 %58
    %62 = vset.pattern.permute.xlu0 0
    %63 = vperm.xlu0 %62, %v29
    %v64 = vpop.permute.xlu0 %63
    %67 = vset.pattern.permute.xlu0 0
    %68 = vperm.xlu0 %67, %v30
    %v69 = vpop.permute.xlu0 %68
    %v71 = vlaneseq
    %v72 = vshrl.u32 %v71, 7
    %v73 = vsub.s32 0, %v72
    %v74 = vrot.slane %v20, %v73
    %v75 = vmul.f32 %v34, %v74
    %v76 = vmul.f32 %v39, %v74
    %v77 = vmul.f32 %v44, %v74
    %v78 = vmul.f32 %v49, %v74
    %v79 = vmul.f32 %v54, %v74
    %v80 = vmul.f32 %v59, %v74
    %v81 = vmul.f32 %v64, %v74
    %v82 = vmul.f32 %v69, %v74
    %v83 = vlaneseq
    %v84 = vshrl.u32 %v83, 7
    %v85 = vsub.s32 0, %v84
    %v86 = vrot.slane %v21, %v85
    %v87 = vadd.f32 %v75, %v86
    %v88 = vadd.f32 %v76, %v86
    %v89 = vadd.f32 %v77, %v86
    %v90 = vadd.f32 %v78, %v86
    %v91 = vadd.f32 %v79, %v86
    %v92 = vadd.f32 %v80, %v86
    %v93 = vadd.f32 %v81, %v86
    %v94 = vadd.f32 %v82, %v86
    %v95 = vtanh.pop %v87
    %v96 = vpack.c.bf16 %v95, %v95
    %v101 = vunpack.c.l.b16 %v16
    %v102 = vunpack.c.l.b16 %v17
    %v103 = vunpack.c.l.b16 %v18
    %v104 = vunpack.c.l.b16 %v19
    %v105 = vpack.c.b16 %v102, %v101
    %v106 = vpack.c.b16 %v104, %v103
    %vm108 = vcmask 203776
    %v110 = vsel %vm108, %v96, 0
    %vm112 = vcmask 1043456
    %vm113 = vcmask 1044480
    %v114 = vsel %vm112, 4294967295, 65535
    %v115 = vsel %vm113, %v114, 0
    %v117 = vand.u32 %v106, %v115
    %119 = vmatprep.subr.bf16.mxu0 0
    %120 = vmatpush1.bf16.msra.mxu0 %v105
    %121 = vmatprep.subr.bf16.mxu0 0
    %122 = vmatpush1.bf16.msra.mxu0 %v117
    %123 = vmatprep.subr.bf16.mxu0 0
    %124 = vmatpush1.bf16.msra.mxu0 0
    %125 = vmatprep.subr.bf16.mxu0 0
    %126 = vmatpush1.bf16.msra.mxu0 0
    %127 = vmatprep.subr.bf16.mxu0 0
    %128 = vmatpush1.bf16.msra.mxu0 0
    %129 = vmatprep.subr.bf16.mxu0 0
    %130 = vmatpush1.bf16.msra.mxu0 0
    %131 = vmatprep.subr.bf16.mxu0 0
    %132 = vmatpush1.bf16.msra.mxu0 0
    %133 = vmatprep.subr.bf16.mxu0 0
    %134 = vmatpush1.bf16.msra.mxu0 0
    %135 = vmatprep.subr.bf16.mxu0 0
    %136 = vmatpush1.bf16.msra.mxu0 0
    %137 = vmatprep.subr.bf16.mxu0 0
    %138 = vmatpush1.bf16.msra.mxu0 0
    %139 = vmatprep.subr.bf16.mxu0 0
    %140 = vmatpush1.bf16.msra.mxu0 0
    %141 = vmatprep.subr.bf16.mxu0 0
    %142 = vmatpush1.bf16.msra.mxu0 0
    %143 = vmatprep.subr.bf16.mxu0 0
    %144 = vmatpush1.bf16.msra.mxu0 0
    %145 = vmatprep.subr.bf16.mxu0 0
    %146 = vmatpush1.bf16.msra.mxu0 0
    %147 = vmatprep.subr.bf16.mxu0 0
    %148 = vmatpush1.bf16.msra.mxu0 0
    %149 = vmatprep.subr.bf16.mxu0 0
    %150 = vmatpush1.bf16.msra.mxu0 0
    %151 = vmatprep.mubr.bf16.mxu0 0
    %152 = vmatmul.mubr.bf16.gmra.mrb[0].mxu0 %v110
    %v153 = vpop.f32.mrb[0].mxu0
    %v154 = vadd.f32 0.0, %v153
    %v155 = vpop.f32.mrb[0].mxu0
    %v156 = vpop.f32.mrb[0].mxu0
    %v157 = vpop.f32.mrb[0].mxu0
    %158 = vdwg.mxu0
    %v159 = vadd.f32 %v88, %v154
    %v160 = vtanh.pop %v159
    %v161 = vpack.c.bf16 %v160, %v160
    %v163 = vsel %vm108, %v161, 0
    %165 = vmatprep.subr.bf16.mxu0 0
    %166 = vmatpush1.bf16.msra.mxu0 %v105
    %167 = vmatprep.subr.bf16.mxu0 0
    %168 = vmatpush1.bf16.msra.mxu0 %v117
    %169 = vmatprep.subr.bf16.mxu0 0
    %170 = vmatpush1.bf16.msra.mxu0 0
    %171 = vmatprep.subr.bf16.mxu0 0
    %172 = vmatpush1.bf16.msra.mxu0 0
    %173 = vmatprep.subr.bf16.mxu0 0
    %174 = vmatpush1.bf16.msra.mxu0 0
    %175 = vmatprep.subr.bf16.mxu0 0
    %176 = vmatpush1.bf16.msra.mxu0 0
    %177 = vmatprep.subr.bf16.mxu0 0
    %178 = vmatpush1.bf16.msra.mxu0 0
    %179 = vmatprep.subr.bf16.mxu0 0
    %180 = vmatpush1.bf16.msra.mxu0 0
    %181 = vmatprep.subr.bf16.mxu0 0
    %182 = vmatpush1.bf16.msra.mxu0 0
    %183 = vmatprep.subr.bf16.mxu0 0
    %184 = vmatpush1.bf16.msra.mxu0 0
    %185 = vmatprep.subr.bf16.mxu0 0
    %186 = vmatpush1.bf16.msra.mxu0 0
    %187 = vmatprep.subr.bf16.mxu0 0
    %188 = vmatpush1.bf16.msra.mxu0 0
    %189 = vmatprep.subr.bf16.mxu0 0
    %190 = vmatpush1.bf16.msra.mxu0 0
    %191 = vmatprep.subr.bf16.mxu0 0
    %192 = vmatpush1.bf16.msra.mxu0 0
    %193 = vmatprep.subr.bf16.mxu0 0
    %194 = vmatpush1.bf16.msra.mxu0 0
    %195 = vmatprep.subr.bf16.mxu0 0
    %196 = vmatpush1.bf16.msra.mxu0 0
    %197 = vmatprep.mubr.bf16.mxu0 0
    %198 = vmatmul.mubr.bf16.gmra.mrb[0].mxu0 %v163
    %v199 = vpop.f32.mrb[0].mxu0
    %v200 = vadd.f32 0.0, %v199
    %v201 = vpop.f32.mrb[0].mxu0
    %v202 = vpop.f32.mrb[0].mxu0
    %v203 = vpop.f32.mrb[0].mxu0
    %204 = vdwg.mxu0
    %v205 = vadd.f32 %v89, %v200
    %v206 = vtanh.pop %v205
    %v207 = vpack.c.bf16 %v206, %v206
    %v209 = vsel %vm108, %v207, 0
    %211 = vmatprep.subr.bf16.mxu0 0
    %212 = vmatpush1.bf16.msra.mxu0 %v105
    %213 = vmatprep.subr.bf16.mxu0 0
    %214 = vmatpush1.bf16.msra.mxu0 %v117
    %215 = vmatprep.subr.bf16.mxu0 0
    %216 = vmatpush1.bf16.msra.mxu0 0
    %217 = vmatprep.subr.bf16.mxu0 0
    %218 = vmatpush1.bf16.msra.mxu0 0
    %219 = vmatprep.subr.bf16.mxu0 0
    %220 = vmatpush1.bf16.msra.mxu0 0
    %221 = vmatprep.subr.bf16.mxu0 0
    %222 = vmatpush1.bf16.msra.mxu0 0
    %223 = vmatprep.subr.bf16.mxu0 0
    %224 = vmatpush1.bf16.msra.mxu0 0
    %225 = vmatprep.subr.bf16.mxu0 0
    %226 = vmatpush1.bf16.msra.mxu0 0
    %227 = vmatprep.subr.bf16.mxu0 0
    %228 = vmatpush1.bf16.msra.mxu0 0
    %229 = vmatprep.subr.bf16.mxu0 0
    %230 = vmatpush1.bf16.msra.mxu0 0
    %231 = vmatprep.subr.bf16.mxu0 0
    %232 = vmatpush1.bf16.msra.mxu0 0
    %233 = vmatprep.subr.bf16.mxu0 0
    %234 = vmatpush1.bf16.msra.mxu0 0
    %235 = vmatprep.subr.bf16.mxu0 0
    %236 = vmatpush1.bf16.msra.mxu0 0
    %237 = vmatprep.subr.bf16.mxu0 0
    %238 = vmatpush1.bf16.msra.mxu0 0
    %239 = vmatprep.subr.bf16.mxu0 0
    %240 = vmatpush1.bf16.msra.mxu0 0
    %241 = vmatprep.subr.bf16.mxu0 0
    %242 = vmatpush1.bf16.msra.mxu0 0
    %243 = vmatprep.mubr.bf16.mxu0 0
    %244 = vmatmul.mubr.bf16.gmra.mrb[0].mxu0 %v209
    %v245 = vpop.f32.mrb[0].mxu0
    %v246 = vadd.f32 0.0, %v245
    %v247 = vpop.f32.mrb[0].mxu0
    %v248 = vpop.f32.mrb[0].mxu0
    %v249 = vpop.f32.mrb[0].mxu0
    %250 = vdwg.mxu0
    %v251 = vadd.f32 %v90, %v246
    %v252 = vtanh.pop %v251
    %v253 = vpack.c.bf16 %v252, %v252
    %v255 = vsel %vm108, %v253, 0
    %257 = vmatprep.subr.bf16.mxu0 0
    %258 = vmatpush1.bf16.msra.mxu0 %v105
    %259 = vmatprep.subr.bf16.mxu0 0
    %260 = vmatpush1.bf16.msra.mxu0 %v117
    %261 = vmatprep.subr.bf16.mxu0 0
    %262 = vmatpush1.bf16.msra.mxu0 0
    %263 = vmatprep.subr.bf16.mxu0 0
    %264 = vmatpush1.bf16.msra.mxu0 0
    %265 = vmatprep.subr.bf16.mxu0 0
    %266 = vmatpush1.bf16.msra.mxu0 0
    %267 = vmatprep.subr.bf16.mxu0 0
    %268 = vmatpush1.bf16.msra.mxu0 0
    %269 = vmatprep.subr.bf16.mxu0 0
    %270 = vmatpush1.bf16.msra.mxu0 0
    %271 = vmatprep.subr.bf16.mxu0 0
    %272 = vmatpush1.bf16.msra.mxu0 0
    %273 = vmatprep.subr.bf16.mxu0 0
    %274 = vmatpush1.bf16.msra.mxu0 0
    %275 = vmatprep.subr.bf16.mxu0 0
    %276 = vmatpush1.bf16.msra.mxu0 0
    %277 = vmatprep.subr.bf16.mxu0 0
    %278 = vmatpush1.bf16.msra.mxu0 0
    %279 = vmatprep.subr.bf16.mxu0 0
    %280 = vmatpush1.bf16.msra.mxu0 0
    %281 = vmatprep.subr.bf16.mxu0 0
    %282 = vmatpush1.bf16.msra.mxu0 0
    %283 = vmatprep.subr.bf16.mxu0 0
    %284 = vmatpush1.bf16.msra.mxu0 0
    %285 = vmatprep.subr.bf16.mxu0 0
    %286 = vmatpush1.bf16.msra.mxu0 0
    %287 = vmatprep.subr.bf16.mxu0 0
    %288 = vmatpush1.bf16.msra.mxu0 0
    %289 = vmatprep.mubr.bf16.mxu0 0
    %290 = vmatmul.mubr.bf16.gmra.mrb[0].mxu0 %v255
    %v291 = vpop.f32.mrb[0].mxu0
    %v292 = vadd.f32 0.0, %v291
    %v293 = vpop.f32.mrb[0].mxu0
    %v294 = vpop.f32.mrb[0].mxu0
    %v295 = vpop.f32.mrb[0].mxu0
    %296 = vdwg.mxu0
    %v297 = vadd.f32 %v91, %v292
    %v298 = vtanh.pop %v297
    %v299 = vpack.c.bf16 %v298, %v298
    %v301 = vsel %vm108, %v299, 0
    %303 = vmatprep.subr.bf16.mxu0 0
    %304 = vmatpush1.bf16.msra.mxu0 %v105
    %305 = vmatprep.subr.bf16.mxu0 0
    %306 = vmatpush1.bf16.msra.mxu0 %v117
    %307 = vmatprep.subr.bf16.mxu0 0
    %308 = vmatpush1.bf16.msra.mxu0 0
    %309 = vmatprep.subr.bf16.mxu0 0
    %310 = vmatpush1.bf16.msra.mxu0 0
    %311 = vmatprep.subr.bf16.mxu0 0
    %312 = vmatpush1.bf16.msra.mxu0 0
    %313 = vmatprep.subr.bf16.mxu0 0
    %314 = vmatpush1.bf16.msra.mxu0 0
    %315 = vmatprep.subr.bf16.mxu0 0
    %316 = vmatpush1.bf16.msra.mxu0 0
    %317 = vmatprep.subr.bf16.mxu0 0
    %318 = vmatpush1.bf16.msra.mxu0 0
    %319 = vmatprep.subr.bf16.mxu0 0
    %320 = vmatpush1.bf16.msra.mxu0 0
    %321 = vmatprep.subr.bf16.mxu0 0
    %322 = vmatpush1.bf16.msra.mxu0 0
    %323 = vmatprep.subr.bf16.mxu0 0
    %324 = vmatpush1.bf16.msra.mxu0 0
    %325 = vmatprep.subr.bf16.mxu0 0
    %326 = vmatpush1.bf16.msra.mxu0 0
    %327 = vmatprep.subr.bf16.mxu0 0
    %328 = vmatpush1.bf16.msra.mxu0 0
    %329 = vmatprep.subr.bf16.mxu0 0
    %330 = vmatpush1.bf16.msra.mxu0 0
    %331 = vmatprep.subr.bf16.mxu0 0
    %332 = vmatpush1.bf16.msra.mxu0 0
    %333 = vmatprep.subr.bf16.mxu0 0
    %334 = vmatpush1.bf16.msra.mxu0 0
    %335 = vmatprep.mubr.bf16.mxu0 0
    %336 = vmatmul.mubr.bf16.gmra.mrb[0].mxu0 %v301
    %v337 = vpop.f32.mrb[0].mxu0
    %v338 = vadd.f32 0.0, %v337
    %v339 = vpop.f32.mrb[0].mxu0
    %v340 = vpop.f32.mrb[0].mxu0
    %v341 = vpop.f32.mrb[0].mxu0
    %342 = vdwg.mxu0
    %v343 = vadd.f32 %v92, %v338
    %v344 = vtanh.pop %v343
    %v345 = vpack.c.bf16 %v344, %v344
    %v347 = vsel %vm108, %v345, 0
    %349 = vmatprep.subr.bf16.mxu0 0
    %350 = vmatpush1.bf16.msra.mxu0 %v105
    %351 = vmatprep.subr.bf16.mxu0 0
    %352 = vmatpush1.bf16.msra.mxu0 %v117
    %353 = vmatprep.subr.bf16.mxu0 0
    %354 = vmatpush1.bf16.msra.mxu0 0
    %355 = vmatprep.subr.bf16.mxu0 0
    %356 = vmatpush1.bf16.msra.mxu0 0
    %357 = vmatprep.subr.bf16.mxu0 0
    %358 = vmatpush1.bf16.msra.mxu0 0
    %359 = vmatprep.subr.bf16.mxu0 0
    %360 = vmatpush1.bf16.msra.mxu0 0
    %361 = vmatprep.subr.bf16.mxu0 0
    %362 = vmatpush1.bf16.msra.mxu0 0
    %363 = vmatprep.subr.bf16.mxu0 0
    %364 = vmatpush1.bf16.msra.mxu0 0
    %365 = vmatprep.subr.bf16.mxu0 0
    %366 = vmatpush1.bf16.msra.mxu0 0
    %367 = vmatprep.subr.bf16.mxu0 0
    %368 = vmatpush1.bf16.msra.mxu0 0
    %369 = vmatprep.subr.bf16.mxu0 0
    %370 = vmatpush1.bf16.msra.mxu0 0
    %371 = vmatprep.subr.bf16.mxu0 0
    %372 = vmatpush1.bf16.msra.mxu0 0
    %373 = vmatprep.subr.bf16.mxu0 0
    %374 = vmatpush1.bf16.msra.mxu0 0
    %375 = vmatprep.subr.bf16.mxu0 0
    %376 = vmatpush1.bf16.msra.mxu0 0
    %377 = vmatprep.subr.bf16.mxu0 0
    %378 = vmatpush1.bf16.msra.mxu0 0
    %379 = vmatprep.subr.bf16.mxu0 0
    %380 = vmatpush1.bf16.msra.mxu0 0
    %381 = vmatprep.mubr.bf16.mxu0 0
    %382 = vmatmul.mubr.bf16.gmra.mrb[0].mxu0 %v347
    %v383 = vpop.f32.mrb[0].mxu0
    %v384 = vadd.f32 0.0, %v383
    %v385 = vpop.f32.mrb[0].mxu0
    %v386 = vpop.f32.mrb[0].mxu0
    %v387 = vpop.f32.mrb[0].mxu0
    %388 = vdwg.mxu0
    %v389 = vadd.f32 %v93, %v384
    %v390 = vtanh.pop %v389
    %v391 = vpack.c.bf16 %v390, %v390
    %v393 = vsel %vm108, %v391, 0
    %395 = vmatprep.subr.bf16.mxu0 0
    %396 = vmatpush1.bf16.msra.mxu0 %v105
    %397 = vmatprep.subr.bf16.mxu0 0
    %398 = vmatpush1.bf16.msra.mxu0 %v117
    %399 = vmatprep.subr.bf16.mxu0 0
    %400 = vmatpush1.bf16.msra.mxu0 0
    %401 = vmatprep.subr.bf16.mxu0 0
    %402 = vmatpush1.bf16.msra.mxu0 0
    %403 = vmatprep.subr.bf16.mxu0 0
    %404 = vmatpush1.bf16.msra.mxu0 0
    %405 = vmatprep.subr.bf16.mxu0 0
    %406 = vmatpush1.bf16.msra.mxu0 0
    %407 = vmatprep.subr.bf16.mxu0 0
    %408 = vmatpush1.bf16.msra.mxu0 0
    %409 = vmatprep.subr.bf16.mxu0 0
    %410 = vmatpush1.bf16.msra.mxu0 0
    %411 = vmatprep.subr.bf16.mxu0 0
    %412 = vmatpush1.bf16.msra.mxu0 0
    %413 = vmatprep.subr.bf16.mxu0 0
    %414 = vmatpush1.bf16.msra.mxu0 0
    %415 = vmatprep.subr.bf16.mxu0 0
    %416 = vmatpush1.bf16.msra.mxu0 0
    %417 = vmatprep.subr.bf16.mxu0 0
    %418 = vmatpush1.bf16.msra.mxu0 0
    %419 = vmatprep.subr.bf16.mxu0 0
    %420 = vmatpush1.bf16.msra.mxu0 0
    %421 = vmatprep.subr.bf16.mxu0 0
    %422 = vmatpush1.bf16.msra.mxu0 0
    %423 = vmatprep.subr.bf16.mxu0 0
    %424 = vmatpush1.bf16.msra.mxu0 0
    %425 = vmatprep.subr.bf16.mxu0 0
    %426 = vmatpush1.bf16.msra.mxu0 0
    %427 = vmatprep.mubr.bf16.mxu0 0
    %428 = vmatmul.mubr.bf16.gmra.mrb[0].mxu0 %v393
    %v429 = vpop.f32.mrb[0].mxu0
    %v430 = vadd.f32 0.0, %v429
    %v431 = vpop.f32.mrb[0].mxu0
    %v432 = vpop.f32.mrb[0].mxu0
    %v433 = vpop.f32.mrb[0].mxu0
    %434 = vdwg.mxu0
    %v435 = vadd.f32 %v94, %v430
    %v436 = vtanh.pop %v435
    %v437 = vpack.c.bf16 %v436, %v436
    %v438 = vlaneseq
    %v439 = vshrl.u32 %v438, 7
    %v440 = vsub.s32 0, %v439
    %v441 = vrot.slane %v22, %v440
    %v443 = vsel %vm108, %v437, 0
    %445 = vmatprep.subr.bf16.mxu0 0
    %446 = vmatpush1.bf16.msra.mxu0 %v105
    %447 = vmatprep.subr.bf16.mxu0 0
    %448 = vmatpush1.bf16.msra.mxu0 %v117
    %449 = vmatprep.subr.bf16.mxu0 0
    %450 = vmatpush1.bf16.msra.mxu0 0
    %451 = vmatprep.subr.bf16.mxu0 0
    %452 = vmatpush1.bf16.msra.mxu0 0
    %453 = vmatprep.subr.bf16.mxu0 0
    %454 = vmatpush1.bf16.msra.mxu0 0
    %455 = vmatprep.subr.bf16.mxu0 0
    %456 = vmatpush1.bf16.msra.mxu0 0
    %457 = vmatprep.subr.bf16.mxu0 0
    %458 = vmatpush1.bf16.msra.mxu0 0
    %459 = vmatprep.subr.bf16.mxu0 0
    %460 = vmatpush1.bf16.msra.mxu0 0
    %461 = vmatprep.subr.bf16.mxu0 0
    %462 = vmatpush1.bf16.msra.mxu0 0
    %463 = vmatprep.subr.bf16.mxu0 0
    %464 = vmatpush1.bf16.msra.mxu0 0
    %465 = vmatprep.subr.bf16.mxu0 0
    %466 = vmatpush1.bf16.msra.mxu0 0
    %467 = vmatprep.subr.bf16.mxu0 0
    %468 = vmatpush1.bf16.msra.mxu0 0
    %469 = vmatprep.subr.bf16.mxu0 0
    %470 = vmatpush1.bf16.msra.mxu0 0
    %471 = vmatprep.subr.bf16.mxu0 0
    %472 = vmatpush1.bf16.msra.mxu0 0
    %473 = vmatprep.subr.bf16.mxu0 0
    %474 = vmatpush1.bf16.msra.mxu0 0
    %475 = vmatprep.subr.bf16.mxu0 0
    %476 = vmatpush1.bf16.msra.mxu0 0
    %477 = vmatprep.mubr.bf16.mxu0 0
    %478 = vmatmul.mubr.bf16.gmra.mrb[0].mxu0 %v443
    %v479 = vpop.f32.mrb[0].mxu0
    %v480 = vadd.f32 %v441, %v479
    %v481 = vpop.f32.mrb[0].mxu0
    %v482 = vpop.f32.mrb[0].mxu0
    %v483 = vpop.f32.mrb[0].mxu0
    %484 = vdwg.mxu0
    %vm485 = vcmask 197632
    %486 = vst.msk [vmem:[#allocation2] sm:$0x3] %vm485, %v480
    // Predicated region
    $region14: #{tpu_custom_call.1} parent=1 // pred_check
      _
    $region15: #{tpu_custom_call.1} parent=1 // pred_check_branch
      %488 = sbr.rel (0) target = $region17
    $region16: #{tpu_custom_call.1} parent=1 // pred_region
      %s490 = ssub.s32 32, 32
      %491 = vsyncadd [#allocation3], %s490
      %s493 = sshll.u32 [#allocation2], 4
      %s494 = int_to_ptr.vmem [resolvable:$true] %s493
      %496 = dma.vmem_to_hbm [thread:$0]  %s494, 32, %s3, [#allocation3]
    $region17: #{tpu_custom_call.1} parent=1 // pred_fallthru
      _
    // Predicated region
    $region18: #{tpu_custom_call.1} parent=1 // pred_check
      _
    $region19: #{tpu_custom_call.1} parent=1 // pred_check_branch
      %498 = sbr.rel (0) target = $region21
    $region20: #{tpu_custom_call.1} parent=1 // pred_region
      %499 = dma.done [#allocation3], 32
    $region21: #{tpu_custom_call.1} parent=1 // pred_fallthru
      _
    %500 = vsyncpa [#allocation3], 1

</llo_original>
